<compile_context>
chip_gen: v6e
topology: v6e:2x2x1
jax: 0.10.0
libtpu: 0.0.40
codegen_flags: <defaults>
</compile_context>

<pallas_src>
import functools

import jax
import jax.numpy as jnp
from jax import lax
from jax.experimental import pallas as pl
from jax.experimental.pallas import tpu as pltpu


def _attention_pooling_kernel(a_ref, p_ref, o_ref, *, n):
    # a_ref : (Bt*N, D)   Bt pooling instances, rows flattened
    # p_ref : (D+2, 4D)   rows 0..D-1 = W, row D = bias, row D+1 = attn weights
    # o_ref : (Bt, 4D)    pooled representation per instance
    d = a_ref.shape[1]
    bt, h4 = o_ref.shape

    a = a_ref[...]                                   # (Bt*N, D)
    w = p_ref[0:d, :]                                # (D, 4D)
    bias = p_ref[d:d + 1, :]                         # (1, 4D)
    attw = p_ref[d + 1:d + 2, :]                     # (1, 4D)

    # Linear: one MXU matmul over all Bt*N rows, f32 accumulate.
    z = jnp.dot(a, w, preferred_element_type=jnp.float32) + bias        # (Bt*N, 4D)
    # Sigmoid via the exact identity 0.5*tanh(0.5*z)+0.5 -> single EUP op.
    h = 0.5 * jnp.tanh(0.5 * z) + 0.5                                    # (Bt*N, 4D)

    # attention_scores = H @ attention_weights : lane contraction on the MXU.
    scores = lax.dot_general(
        h, attw,
        dimension_numbers=(((1,), (1,)), ((), ())),
        preferred_element_type=jnp.float32)                              # (Bt*N, 1)

    # Per-instance softmax over the N rows.  (Bt*N, 1) -> (Bt, N, 1) is a
    # sublane-tile-aligned split (N % 8 == 0), so the reductions over axis=1
    # stay cheap cross-sublane reduces (no lane relayout, no extra copy).
    s3 = scores.reshape(bt, n, 1)
    m = jnp.max(s3, axis=1, keepdims=True)                               # (Bt,1,1)
    e = jnp.exp(s3 - m)                                                  # (Bt,N,1)
    denom = jnp.sum(e, axis=1, keepdims=True)                            # (Bt,1,1)
    wgt = e * pl.reciprocal(denom)            # exact (approx=False)       (Bt,N,1)

    # weighted_rep = sum_N weights * H : VPU broadcast-multiply + sublane sum
    # (MXU is otherwise idle here; avoids Bt tiny K=N matmuls).
    h3 = h.reshape(bt, n, h4)                                            # (Bt,N,4D)
    pooled = jnp.sum(wgt * h3, axis=1)                                   # (Bt, 4D)

    o_ref[...] = pooled.astype(o_ref.dtype)


def attention_pooling_batched(a, w, b, attw, *, bt=None):
    """a: (B, N, D) f32, w: (D, 4D), b: (4D,), attw: (4D,) -> (B, 4D)."""
    bsz, n, d = a.shape
    h4 = w.shape[1]

    if bt is None:
        bt = bsz                    # small batches: whole batch in one grid step
    assert bsz % bt == 0, "batch tile must divide the batch"
    assert bt == bsz or bt % 8 == 0, \
        "when tiling the batch, keep the output block sublane-aligned"

    # Single resident parameter operand: [W ; bias ; attention_weights].
    params = jnp.concatenate([w, b[None, :], attw[None, :]], axis=0)     # (D+2, 4D)
    # Present A flattened so each grid step sees one 2-D (Bt*N, D) tile.
    a_flat = a.reshape(bsz * n, d)                                       # (B*N, D)

    kernel = functools.partial(_attention_pooling_kernel, n=n)
    out = pl.pallas_call(
        kernel,
        out_shape=jax.ShapeDtypeStruct((bsz, h4), jnp.float32),
        grid_spec=pl.GridSpec(
            grid=(bsz // bt,),
            in_specs=[
                pl.BlockSpec((bt * n, d), lambda i: (i, 0)),             # A tile
                pl.BlockSpec((d + 2, h4), lambda i: (0, 0)),             # params
            ],
            out_specs=pl.BlockSpec((bt, h4), lambda i: (i, 0)),
        ),
        compiler_params=pltpu.CompilerParams(
            # Per-step work is sub-us at these sizes; a 2-TC split only adds
            # sync cost, so the (length-1) grid axis stays "arbitrary".
            dimension_semantics=("arbitrary",),
        ),
    )(a_flat, params)
    return out


def attention_pooling(a, w, b, attw):
    """Module-faithful forward: a (N, D) -> (4D,)."""
    return attention_pooling_batched(a[None], w, b, attw)[0]


def reference(a, w, b, attw):
    z = a @ w + b
    h = jax.nn.sigmoid(z)
    scores = h @ attw
    sm = jax.nn.softmax(scores, axis=0)
    return jnp.sum(h * sm[:, None], axis=0)


if __name__ == "__main__":
    key = jax.random.PRNGKey(0)
    k_a, k_w, k_b, k_attw = jax.random.split(key, 4)

    B = 4            # pooling instances batched into ONE grid step
    N = 8            # rows pooled over (softmax / sum axis)
    input_dim = 32   # module's input_dim
    hidden = 4 * input_dim  # 128 (lane-dense output)

    # Deterministic synthetic parameters (shapes follow the module's __init__).
    a = jax.random.normal(k_a, (B, N, input_dim), dtype=jnp.float32)
    # nn.Linear(input_dim, 4*input_dim): weight (4D, D) stored transposed (D, 4D)
    w = jax.random.normal(k_w, (input_dim, hidden), dtype=jnp.float32) * 0.1
    b = jax.random.normal(k_b, (hidden,), dtype=jnp.float32) * 0.1
    # nn.Parameter(torch.randn(input_dim * 4))
    attw = jax.random.normal(k_attw, (hidden,), dtype=jnp.float32)

    # Batched path (one grid step for the whole batch).
    out_b = attention_pooling_batched(a, w, b, attw)
    jax.block_until_ready(out_b)
    ref_b = jnp.stack([reference(a[i], w, b, attw) for i in range(B)])
    assert out_b.shape == (B, hidden)
    # Tolerance covers MXU default-precision f32 matmul + EUP tanh precision;
    # the softmax reciprocal is now exact (approx=False).
    assert jnp.allclose(out_b, ref_b, atol=1e-3, rtol=1e-3), "batched mismatch"

    # Single-instance (module-faithful) path.
    out1 = attention_pooling(a[0], w, b, attw)
    jax.block_until_ready(out1)
    assert out1.shape == (hidden,)
    assert jnp.allclose(out1, ref_b[0], atol=1e-3, rtol=1e-3), "single mismatch"

    print("KERNEL_OK")
</pallas_src>

<mosaic_0001>
module attributes {stable_mosaic.version = 11 : i64} {
  func.func @_attention_pooling_kernel(%arg0: i32, %arg1: memref<32x32xf32, #tpu.memory_space<vmem>>, %arg2: memref<34x128xf32, #tpu.memory_space<vmem>>, %arg3: memref<4x128xf32, #tpu.memory_space<vmem>>) attributes {dimension_semantics = [#tpu.dimension_semantics<arbitrary>], iteration_bounds = array<i64: 1>, scalar_prefetch = 0 : i64, scratch_operands = 0 : i64, tpu.core_type = #tpu.core_type<tc>, window_params = [{transform_indices = @transform_0, window_bounds = array<i64: 32, 32>}, {pipeline_mode = #tpu.pipeline_mode<synchronous>, transform_indices = @transform_1, window_bounds = array<i64: 34, 128>}, {transform_indices = @transform_2, window_bounds = array<i64: 4, 128>}]} {
    %c0 = arith.constant 0 : index
    %c0_0 = arith.constant 0 : index
    %0 = vector.load %arg1[%c0, %c0_0] : memref<32x32xf32, #tpu.memory_space<vmem>>, vector<32x32xf32>
    %c0_1 = arith.constant 0 : index
    %c0_2 = arith.constant 0 : index
    %1 = vector.load %arg2[%c0_1, %c0_2] : memref<34x128xf32, #tpu.memory_space<vmem>>, vector<32x128xf32>
    %c32 = arith.constant 32 : index
    %c0_3 = arith.constant 0 : index
    %2 = vector.load %arg2[%c32, %c0_3] : memref<34x128xf32, #tpu.memory_space<vmem>>, vector<1x128xf32>
    %c33 = arith.constant 33 : index
    %c0_4 = arith.constant 0 : index
    %3 = vector.load %arg2[%c33, %c0_4] : memref<34x128xf32, #tpu.memory_space<vmem>>, vector<1x128xf32>
    %cst = arith.constant dense<0.000000e+00> : vector<32x128xf32>
    %4 = tpu.matmul %0, %1, %cst {dimension_numbers = #tpu.dot_dimension_numbers<[1], [0], [0], [1], [0, 0, 1, 1], [], []>} : vector<32x32xf32>, vector<32x128xf32>, vector<32x128xf32> -> vector<32x128xf32>
    %5 = vector.broadcast %2 : vector<1x128xf32> to vector<32x128xf32>
    %6 = arith.addf %4, %5 : vector<32x128xf32>
    %cst_5 = arith.constant 5.000000e-01 : f32
    %7 = vector.broadcast %cst_5 : f32 to vector<32x128xf32>
    %8 = arith.mulf %7, %6 : vector<32x128xf32>
    %9 = math.tanh %8 : vector<32x128xf32>
    %cst_6 = arith.constant 5.000000e-01 : f32
    %10 = vector.broadcast %cst_6 : f32 to vector<32x128xf32>
    %11 = arith.mulf %10, %9 : vector<32x128xf32>
    %cst_7 = arith.constant 5.000000e-01 : f32
    %12 = vector.broadcast %cst_7 : f32 to vector<32x128xf32>
    %13 = arith.addf %11, %12 : vector<32x128xf32>
    %cst_8 = arith.constant dense<0.000000e+00> : vector<32x1xf32>
    %14 = tpu.matmul %13, %3, %cst_8 {dimension_numbers = #tpu.dot_dimension_numbers<[1], [1], [0], [0], [0, 0, 1, 0], [], []>} : vector<32x128xf32>, vector<1x128xf32>, vector<32x1xf32> -> vector<32x1xf32>
    %15 = vector.shape_cast %14 : vector<32x1xf32> to vector<4x8x1xf32>
    %cst_9 = arith.constant dense<0xFF800000> : vector<4x1xf32>
    %16 = vector.multi_reduction <maximumf>, %15, %cst_9 [1] : vector<4x8x1xf32> to vector<4x1xf32>
    %17 = vector.shape_cast %16 : vector<4x1xf32> to vector<4x1x1xf32>
    %18 = vector.broadcast %17 : vector<4x1x1xf32> to vector<4x8x1xf32>
    %19 = arith.subf %15, %18 : vector<4x8x1xf32>
    %20 = math.exp %19 : vector<4x8x1xf32>
    %cst_10 = arith.constant dense<0.000000e+00> : vector<4x1xf32>
    %21 = vector.multi_reduction <add>, %20, %cst_10 [1] : vector<4x8x1xf32> to vector<4x1xf32>
    %22 = vector.shape_cast %21 : vector<4x1xf32> to vector<4x1x1xf32>
    %23 = tpu.reciprocal %22 : vector<4x1x1xf32> -> vector<4x1x1xf32>
    %24 = vector.broadcast %23 : vector<4x1x1xf32> to vector<4x8x1xf32>
    %25 = arith.mulf %20, %24 : vector<4x8x1xf32>
    %26 = vector.shape_cast %13 : vector<32x128xf32> to vector<4x8x128xf32>
    %27 = vector.broadcast %25 : vector<4x8x1xf32> to vector<4x8x128xf32>
    %28 = arith.mulf %27, %26 : vector<4x8x128xf32>
    %cst_11 = arith.constant dense<0.000000e+00> : vector<4x128xf32>
    %29 = vector.multi_reduction <add>, %28, %cst_11 [1] : vector<4x8x128xf32> to vector<4x128xf32>
    %c0_12 = arith.constant 0 : index
    %c0_13 = arith.constant 0 : index
    %30 = vector.load %arg3[%c0_12, %c0_13] : memref<4x128xf32, #tpu.memory_space<vmem>>, vector<4x128xf32>
    tpu.vector_store %arg3[%c0_12, %c0_13], %29 {strides = array<i32>} : memref<4x128xf32, #tpu.memory_space<vmem>>, vector<4x128xf32>,
    return
  }
  func.func @transform_0(%arg0: i32) -> (i32, i32) {
    %c0_i32 = arith.constant 0 : i32
    %c0_i32_0 = arith.constant 0 : i32
    return %arg0, %c0_i32 : i32, i32
  }
  func.func @transform_1(%arg0: i32) -> (i32, i32) {
    %c0_i32 = arith.constant 0 : i32
    %c0_i32_0 = arith.constant 0 : i32
    %c0_i32_1 = arith.constant 0 : i32
    return %c0_i32, %c0_i32_0 : i32, i32
  }
  func.func @transform_2(%arg0: i32) -> (i32, i32) {
    %c0_i32 = arith.constant 0 : i32
    %c0_i32_0 = arith.constant 0 : i32
    return %arg0, %c0_i32 : i32, i32
  }
}

</mosaic_0001>

<llo_original>
// kernel: tpu_custom_call.1
$region0: #{tpu_custom_call.1}
  #allocation0 [shape = 'u32[]', space=smem, size = 0x4, offset = 0x4, fixed_abs, tag = 'smem constant byte address 0x4 - core index']
  #allocation1 [shape = 'u32[144,128]{1,0:T(1,128)}', space=vmem, size = 0x12000, scoped, tag = 'internal scratch']
  %s0 = inlined_call_operand.hbm [shape: f32[32,32], index: 0, kind: input, shape index: {}]
  %s1 = inlined_call_operand.hbm [shape: f32[34,128], index: 1, kind: input, shape index: {}]
  %s2 = inlined_call_operand.hbm [shape: f32[4,128], index: 2, kind: output, shape index: {}]
  %s3 = sld [smem:[#allocation0]]
  $region26: #{tpu_custom_call.1} parent=0
    _
  %s5 = ssub.s32 1, %s3
  %s6 = scalar_select 0, %s5, %s3
  $region1: #{tpu_custom_call.1} parent=0
    #allocation2 [shape = 'u8[16384]{0}', space=vmem, size = 0x4000, scoped, tag = 'input window, operand 0, single buffered']
    #allocation3 [shape = 's32[1]{0}', space=sflag, size = 0x4, scoped, tag = 'scoped memory for tpu_custom_call.1']
    #allocation4 [shape = 's32[1]{0}', space=sflag, size = 0x4, scoped, tag = 'scoped memory for tpu_custom_call.1']
    #allocation5 [shape = 'u8[20480]{0}', space=vmem, size = 0x5000, scoped, tag = 'input window, operand 1, single buffered']
    #allocation6 [shape = 's32[1]{0}', space=sflag, size = 0x4, scoped, tag = 'scoped memory for tpu_custom_call.1']
    #allocation7 [shape = 'u8[2048]{0}', space=vmem, size = 0x800, scoped, tag = 'output window, operand 0, single buffered']
    %7 = vsyncpa [#allocation3], 0
    %8 = vsyncpa [#allocation6], 0
    %9 = vsyncpa [#allocation4], 0
    // Predicated region
    $region2: #{tpu_custom_call.1} parent=1 // pred_check
      _
    $region3: #{tpu_custom_call.1} parent=1 // pred_check_branch
      %11 = sbr.rel (0) target = $region5
    $region4: #{tpu_custom_call.1} parent=1 // pred_region
      %s13 = ssub.s32 512, 512
      %14 = vsyncadd [#allocation3], %s13
      %s15 = sshll.u32 [#allocation2], 4
      %s16 = int_to_ptr.vmem [resolvable:$true] %s15
      %21 = dma.hbm_to_vmem [thread:$0]  %s0, 512, %s16, [#allocation3], 128, 128, 8
    $region5: #{tpu_custom_call.1} parent=1 // pred_fallthru
      _
    // Predicated region
    $region6: #{tpu_custom_call.1} parent=1 // pred_check
      _
    $region7: #{tpu_custom_call.1} parent=1 // pred_check_branch
      %23 = sbr.rel (0) target = $region9
    $region8: #{tpu_custom_call.1} parent=1 // pred_region
      %s25 = ssub.s32 640, 640
      %26 = vsyncadd [#allocation6], %s25
      %s27 = sshll.u32 [#allocation5], 4
      %s28 = int_to_ptr.vmem [resolvable:$true] %s27
      %33 = dma.hbm_to_vmem [thread:$0]  %s1, 640, %s28, [#allocation6], 128, 128, 8
    $region9: #{tpu_custom_call.1} parent=1 // pred_fallthru
      _
    // Predicated region
    $region10: #{tpu_custom_call.1} parent=1 // pred_check
      _
    $region11: #{tpu_custom_call.1} parent=1 // pred_check_branch
      %35 = sbr.rel (0) target = $region13
    $region12: #{tpu_custom_call.1} parent=1 // pred_region
      %36 = dma.done [#allocation3], 512
    $region13: #{tpu_custom_call.1} parent=1 // pred_fallthru
      _
    // Predicated region
    $region14: #{tpu_custom_call.1} parent=1 // pred_check
      _
    $region15: #{tpu_custom_call.1} parent=1 // pred_check_branch
      %38 = sbr.rel (0) target = $region17
    $region16: #{tpu_custom_call.1} parent=1 // pred_region
      %39 = dma.done [#allocation6], 640
    $region17: #{tpu_custom_call.1} parent=1 // pred_fallthru
      _
    %v40 = vld [vmem:[#allocation2] sm:$0xff]
    %v41 = vld [vmem:[#allocation2 + $0x8] sm:$0xff]
    %v42 = vld [vmem:[#allocation2 + $0x10] sm:$0xff]
    %v43 = vld [vmem:[#allocation2 + $0x18] sm:$0xff]
    %v44 = vld [vmem:[#allocation5] sm:$0xff]
    %v45 = vld [vmem:[#allocation5 + $0x8] sm:$0xff]
    %v46 = vld [vmem:[#allocation5 + $0x10] sm:$0xff]
    %v47 = vld [vmem:[#allocation5 + $0x18] sm:$0xff]
    %v48 = vld [vmem:[#allocation5 + $0x20] sm:$0x1]
    %v49 = vld [vmem:[#allocation5 + $0x21] sm:$0x1]
    %v50 = vlaneseq
    %v51 = vshrl.u32 %v50, 7
    %v52 = vsub.s32 0, %v51
    %v53 = vrot.slane %v48, %v52
    %vm54 = vcmask 261120
    %v56 = vsel %vm54, %v40, 0
    %v59 = vsel %vm54, %v41, 0
    %v62 = vsel %vm54, %v42, 0
    %v65 = vsel %vm54, %v43, 0
    %67 = vmatprep.subr.mxu0 0.0
    %68 = vmatpush1.msra.mxu0 0.0
    %69 = vmatprep.subr.mxu0 0.0
    %70 = vmatpush1.msra.mxu0 0.0
    %71 = vmatprep.subr.mxu0 0.0
    %72 = vmatpush1.msra.mxu0 0.0
    %73 = vmatprep.subr.mxu0 0.0
    %74 = vmatpush1.msra.mxu0 0.0
    %75 = vmatprep.subr.mxu0 0.0
    %76 = vmatpush1.msra.mxu0 0.0
    %77 = vmatprep.subr.mxu0 0.0
    %78 = vmatpush1.msra.mxu0 0.0
    %79 = vmatprep.subr.mxu0 0.0
    %80 = vmatpush1.msra.mxu0 0.0
    %81 = vmatprep.subr.mxu0 0.0
    %82 = vmatpush1.msra.mxu0 0.0
    %83 = vmatprep.subr.mxu0 0.0
    %84 = vmatpush1.msra.mxu0 0.0
    %85 = vmatprep.subr.mxu0 0.0
    %86 = vmatpush1.msra.mxu0 0.0
    %87 = vmatprep.subr.mxu0 0.0
    %88 = vmatpush1.msra.mxu0 0.0
    %89 = vmatprep.subr.mxu0 0.0
    %90 = vmatpush1.msra.mxu0 0.0
    %91 = vmatprep.subr.mxu0 0.0
    %92 = vmatpush1.msra.mxu0 %v47
    %93 = vmatprep.subr.mxu0 0.0
    %94 = vmatpush1.msra.mxu0 %v46
    %95 = vmatprep.subr.mxu0 0.0
    %96 = vmatpush1.msra.mxu0 %v45
    %97 = vmatprep.subr.mxu0 0.0
    %98 = vmatpush1.msra.mxu0 %v44
    %99 = vmatprep.subr.mxu0 0.0
    %100 = vmatpush2.msra.mxu0 0.0
    %101 = vmatprep.subr.mxu0 0.0
    %102 = vmatpush2.msra.mxu0 0.0
    %103 = vmatprep.subr.mxu0 0.0
    %104 = vmatpush2.msra.mxu0 0.0
    %105 = vmatprep.subr.mxu0 0.0
    %106 = vmatpush2.msra.mxu0 0.0
    %107 = vmatprep.subr.mxu0 0.0
    %108 = vmatpush2.msra.mxu0 0.0
    %109 = vmatprep.subr.mxu0 0.0
    %110 = vmatpush2.msra.mxu0 0.0
    %111 = vmatprep.subr.mxu0 0.0
    %112 = vmatpush2.msra.mxu0 0.0
    %113 = vmatprep.subr.mxu0 0.0
    %114 = vmatpush2.msra.mxu0 0.0
    %115 = vmatprep.subr.mxu0 0.0
    %116 = vmatpush2.msra.mxu0 0.0
    %117 = vmatprep.subr.mxu0 0.0
    %118 = vmatpush2.msra.mxu0 0.0
    %119 = vmatprep.subr.mxu0 0.0
    %120 = vmatpush2.msra.mxu0 0.0
    %121 = vmatprep.subr.mxu0 0.0
    %122 = vmatpush2.msra.mxu0 0.0
    %123 = vmatprep.subr.mxu0 0.0
    %124 = vmatpush2.msra.mxu0 0.0
    %125 = vmatprep.subr.mxu0 0.0
    %126 = vmatpush2.msra.mxu0 0.0
    %127 = vmatprep.subr.mxu0 0.0
    %128 = vmatpush2.msra.mxu0 0.0
    %129 = vmatprep.subr.mxu0 0.0
    %130 = vmatpush2.msra.mxu0 0.0
    %131 = vmatprep.mubr.f32.mxu0 0.0
    %132 = vmatmul.mubr.f32.gmra.mxu0 %v56
    %v133 = vpop.f32.mrf.mxu0
    %v134 = vadd.f32 %v53, %v133
    %v135 = vpop.f32.mrf.mxu0
    %136 = vmatprep.mubr.f32.mxu0 0.0
    %137 = vmatmul.mubr.f32.gmra.mxu0 %v59
    %v138 = vpop.f32.mrf.mxu0
    %v139 = vadd.f32 %v53, %v138
    %v140 = vpop.f32.mrf.mxu0
    %141 = vmatprep.mubr.f32.mxu0 0.0
    %142 = vmatmul.mubr.f32.gmra.mxu0 %v62
    %v143 = vpop.f32.mrf.mxu0
    %v144 = vadd.f32 %v53, %v143
    %v145 = vpop.f32.mrf.mxu0
    %146 = vmatprep.mubr.f32.mxu0 0.0
    %147 = vmatmul.mubr.f32.gmra.mxu0 %v65
    %v148 = vpop.f32.mrf.mxu0
    %v149 = vadd.f32 %v53, %v148
    %v150 = vpop.f32.mrf.mxu0
    %151 = vdwg.mxu0
    %v152 = vmul.f32 %v134, 0.5
    %v153 = vmul.f32 %v139, 0.5
    %v154 = vmul.f32 %v144, 0.5
    %v155 = vmul.f32 %v149, 0.5
    %v156 = vtanh.pop %v152
    %v157 = vtanh.pop %v153
    %v158 = vtanh.pop %v154
    %v159 = vtanh.pop %v155
    %v160 = vmul.f32 %v156, 0.5
    %v161 = vmul.f32 %v157, 0.5
    %v162 = vmul.f32 %v158, 0.5
    %v163 = vmul.f32 %v159, 0.5
    %v164 = vadd.f32 %v160, 0.5
    %v165 = vadd.f32 %v161, 0.5
    %v166 = vadd.f32 %v162, 0.5
    %v167 = vadd.f32 %v163, 0.5
    %v168 = vlaneseq
    %v169 = vshrl.u32 %v168, 7
    %v170 = vsub.s32 0, %v169
    %v171 = vrot.slane %v49, %v170
    %v172 = vmul.f32 %v164, %v171
    %v173 = vmul.f32 %v165, %v171
    %v174 = vmul.f32 %v166, %v171
    %v175 = vmul.f32 %v167, %v171
    %176 = vadd.xlane.f32.xlu0 %v172
    %v177 = vpop.xlane.xlu0 %176
    %178 = vadd.xlane.f32.xlu0 %v173
    %v179 = vpop.xlane.xlu0 %178
    %180 = vadd.xlane.f32.xlu0 %v174
    %v181 = vpop.xlane.xlu0 %180
    %182 = vadd.xlane.f32.xlu0 %v175
    %v183 = vpop.xlane.xlu0 %182
    %v184 = vrot.slane %v177, 4
    %v185 = vmax.f32 %v177, %v184
    %v186 = vrot.slane %v185, 2
    %v187 = vmax.f32 %v185, %v186
    %v188 = vrot.slane %v187, 1
    %v189 = vmax.f32 %v187, %v188
    %v190 = vrot.slane %v179, 4
    %v191 = vmax.f32 %v179, %v190
    %v192 = vrot.slane %v191, 2
    %v193 = vmax.f32 %v191, %v192
    %v194 = vrot.slane %v193, 1
    %v195 = vmax.f32 %v193, %v194
    %v196 = vrot.slane %v181, 4
    %v197 = vmax.f32 %v181, %v196
    %v198 = vrot.slane %v197, 2
    %v199 = vmax.f32 %v197, %v198
    %v200 = vrot.slane %v199, 1
    %v201 = vmax.f32 %v199, %v200
    %v202 = vrot.slane %v183, 4
    %v203 = vmax.f32 %v183, %v202
    %v204 = vrot.slane %v203, 2
    %v205 = vmax.f32 %v203, %v204
    %v206 = vrot.slane %v205, 1
    %v207 = vmax.f32 %v205, %v206
    %v208 = vsub.f32 %v177, %v189
    %v209 = vsub.f32 %v179, %v195
    %v210 = vsub.f32 %v181, %v201
    %v211 = vsub.f32 %v183, %v207
    %v212 = vmul.f32 %v208, 1.442695
    %v213 = vpow.pop %v212
    %v214 = vmul.f32 %v209, 1.442695
    %v215 = vpow.pop %v214
    %v216 = vmul.f32 %v210, 1.442695
    %v217 = vpow.pop %v216
    %v218 = vmul.f32 %v211, 1.442695
    %v219 = vpow.pop %v218
    %v220 = vrot.slane %v213, 4
    %v221 = vadd.f32 %v213, %v220
    %v222 = vrot.slane %v221, 2
    %v223 = vadd.f32 %v221, %v222
    %v224 = vrot.slane %v223, 1
    %v225 = vadd.f32 %v223, %v224
    %v226 = vrot.slane %v215, 4
    %v227 = vadd.f32 %v215, %v226
    %v228 = vrot.slane %v227, 2
    %v229 = vadd.f32 %v227, %v228
    %v230 = vrot.slane %v229, 1
    %v231 = vadd.f32 %v229, %v230
    %v232 = vrot.slane %v217, 4
    %v233 = vadd.f32 %v217, %v232
    %v234 = vrot.slane %v233, 2
    %v235 = vadd.f32 %v233, %v234
    %v236 = vrot.slane %v235, 1
    %v237 = vadd.f32 %v235, %v236
    %v238 = vrot.slane %v219, 4
    %v239 = vadd.f32 %v219, %v238
    %v240 = vrot.slane %v239, 2
    %v241 = vadd.f32 %v239, %v240
    %v242 = vrot.slane %v241, 1
    %v243 = vadd.f32 %v241, %v242
    %v244 = vrcp.pop %v225
    %v245 = vrcp.pop %v231
    %v246 = vrcp.pop %v237
    %v247 = vrcp.pop %v243
    %v248 = vmul.f32 %v213, %v244
    %v249 = vmul.f32 %v215, %v245
    %v250 = vmul.f32 %v217, %v246
    %v251 = vmul.f32 %v219, %v247
    %v252 = vmul.f32 %v248, %v164
    %v253 = vmul.f32 %v249, %v165
    %v254 = vmul.f32 %v250, %v166
    %v255 = vmul.f32 %v251, %v167
    %v256 = vrot.slane %v252, 4
    %v257 = vadd.f32 %v252, %v256
    %v258 = vrot.slane %v257, 2
    %v259 = vadd.f32 %v257, %v258
    %v260 = vrot.slane %v259, 1
    %v261 = vadd.f32 %v259, %v260
    %v262 = vrot.slane %v253, 4
    %v263 = vadd.f32 %v253, %v262
    %v264 = vrot.slane %v263, 2
    %v265 = vadd.f32 %v263, %v264
    %v266 = vrot.slane %v265, 1
    %v267 = vadd.f32 %v265, %v266
    %v268 = vrot.slane %v254, 4
    %v269 = vadd.f32 %v254, %v268
    %v270 = vrot.slane %v269, 2
    %v271 = vadd.f32 %v269, %v270
    %v272 = vrot.slane %v271, 1
    %v273 = vadd.f32 %v271, %v272
    %v274 = vrot.slane %v255, 4
    %v275 = vadd.f32 %v255, %v274
    %v276 = vrot.slane %v275, 2
    %v277 = vadd.f32 %v275, %v276
    %v278 = vrot.slane %v277, 1
    %v279 = vadd.f32 %v277, %v278
    %vm284 = vcmask 1041409
    %v285 = vsel %vm284, %v267, %v261
    %vm286 = vcmask 1042434
    %v287 = vsel %vm286, %v273, %v285
    %vm288 = vcmask 1043459
    %v289 = vsel %vm288, %v279, %v287
    %291 = vst [vmem:[#allocation7] sm:$0xf] %v289
    // Predicated region
    $region18: #{tpu_custom_call.1} parent=1 // pred_check
      _
    $region19: #{tpu_custom_call.1} parent=1 // pred_check_branch
      %293 = sbr.rel (0) target = $region21
    $region20: #{tpu_custom_call.1} parent=1 // pred_region
      %s295 = ssub.s32 64, 64
      %296 = vsyncadd [#allocation4], %s295
      %s298 = sshll.u32 [#allocation7], 4
      %s299 = int_to_ptr.vmem [resolvable:$true] %s298
      %301 = dma.vmem_to_hbm [thread:$0]  %s299, 64, %s2, [#allocation4]
    $region21: #{tpu_custom_call.1} parent=1 // pred_fallthru
      _
    // Predicated region
    $region22: #{tpu_custom_call.1} parent=1 // pred_check
      _
    $region23: #{tpu_custom_call.1} parent=1 // pred_check_branch
      %303 = sbr.rel (0) target = $region25
    $region24: #{tpu_custom_call.1} parent=1 // pred_region
      %304 = dma.done [#allocation4], 64
    $region25: #{tpu_custom_call.1} parent=1 // pred_fallthru
      _
    %305 = vsyncpa [#allocation3], 1
    %306 = vsyncpa [#allocation6], 1
    %307 = vsyncpa [#allocation4], 1

</llo_original>
